<compile_context>
chip_gen: v7x
topology: tpu7x:2x2x1
jax: 0.10.0
libtpu: 0.0.40
codegen_flags: <defaults>
</compile_context>

<pallas_src>
import jax
import jax.numpy as jnp
from jax import lax
from jax.experimental import pallas as pl
from jax.experimental.pallas import tpu as pltpu


# ----------------------------------------------------------------------------
# Helpers
# ----------------------------------------------------------------------------
def _round_up(x, m):
    return ((x + m - 1) // m) * m


def _pick_tile(n, unit, cap):
    """Largest multiple of `unit` that divides n and is <= max(cap, unit)."""
    t = min(n, max(unit, (cap // unit) * unit))
    while n % t:
        t -= unit
    return t


def _vmem_limit(needed_bytes):
    # Generous headroom, but stay safely below v7x's 64 MiB physical VMEM.
    return int(min(max(4 * needed_bytes, 32 << 20), 56 << 20))


# ----------------------------------------------------------------------------
# Pallas kernels
# ----------------------------------------------------------------------------
def matmul_bias_kernel(x_ref, w_ref, b_ref, o_ref):
    """o = x @ W + b. W already transposed to (K, N); b is (1, N) f32.

    Activations are cast in-kernel to the weight dtype (bf16 when requested) so
    the MXU runs bf16 x bf16 with an f32 accumulator; no-op when W is f32.
    """
    x = x_ref[...].astype(w_ref.dtype)
    o_ref[...] = (jnp.dot(x, w_ref[...], preferred_element_type=jnp.float32)
                  + b_ref[...]).astype(o_ref.dtype)


def rnn_recurrence_kernel(t_valid_ref, pre_ref, whh_ref, out_ref, h_ref):
    """One chunk of timesteps of the Elman recurrence.

    t_valid_ref: (1,) SMEM  true sequence length T (scalar prefetch)
    pre_ref:     (Tc, B, H) precomputed x_t @ W_ih^T + b_ih + b_hh (f32)
    whh_ref:     (H, H)     W_hh^T (resident across all chunks; f32 or bf16)
    out_ref:     (Tc, B, H) hidden states for this chunk (f32)
    h_ref:       (B, H)     VMEM scratch carrying hidden state across chunks
    """
    chunk = pl.program_id(0)
    tc = pre_ref.shape[0]

    @pl.when(chunk == 0)
    def _():
        # init_hidden(): zeros
        h_ref[...] = jnp.zeros_like(h_ref)

    # Number of valid steps in this chunk: skips padded tail timesteps entirely
    # (and guarantees h_ref is never mutated past step T).
    n_valid = jnp.clip(t_valid_ref[0] - chunk * tc, 0, tc)

    # TODO(synk): at realistic B/H, drive the MXU explicitly
    # (pltpu.matmul_push_rhs once per chunk + matmul_acc_lhs per step) so W_hh^T
    # stays staged in the weight registers instead of being re-pushed by jnp.dot
    # every timestep, and interleave >=2 independent batch sub-tiles per step to
    # hide the per-step MXU push/drain + EUP tanh latency chain.
    def step(t, carry):
        @pl.when(t < n_valid)
        def _():
            h = h_ref[...]
            h_new = jnp.tanh(
                pre_ref[t]
                + jnp.dot(h.astype(whh_ref.dtype), whh_ref[...],
                          preferred_element_type=jnp.float32))
            out_ref[t] = h_new
            h_ref[...] = h_new
        return carry

    # Partial unroll: keeps LLO scheduler visibility without blowing up vreg
    # live ranges at realistic B*H.
    lax.fori_loop(0, tc, step, 0, unroll=min(8, tc))


# ----------------------------------------------------------------------------
# Wrappers
# ----------------------------------------------------------------------------
def run_matmul_bias(x2d, w, b_row, *, tile_m=512, tile_n=512,
                    out_dtype=jnp.float32, vmem_budget=24 << 20):
    """x2d: (M, K) f32, w: (K, N) f32/bf16, b_row: (1, N) f32 -> (M, N).

    Tiled over M and N ('parallel','parallel'); N must be a multiple of 128
    (callers pad) so the output stores are lane-dense.
    """
    M, K = x2d.shape
    N = w.shape[1]
    assert N % 128 == 0, "pad N to a multiple of 128 before calling"

    tm = min(tile_m, _round_up(M, 8))
    # Ensure >= 2 parallel M tiles when possible so both v7x TensorCores get work.
    if M >= 16 and _round_up(M, tm) // tm < 2:
        tm = _round_up(pl.cdiv(M, 2), 8)
    tn = _pick_tile(N, 128, tile_n)

    def footprint(tm_, tn_):
        # double-buffered in/out blocks
        return 2 * (tm_ * K * x2d.dtype.itemsize
                    + K * tn_ * w.dtype.itemsize
                    + tn_ * 4
                    + tm_ * tn_ * 4)

    # Shrink tiles until the per-call footprint fits a conservative VMEM budget
    # (safe on v7x's 64 MiB VMEM; v5e/v6e simply get the same, still-large tiles).
    while footprint(tm, tn) > vmem_budget and (tm > 8 or tn > 128):
        if tm >= tn and tm > 8:
            tm = max(8, tm // 2)
        elif tn > 128:
            tn = _pick_tile(N, 128, tn // 2)
        else:
            tm = max(8, tm // 2)

    Mp = _round_up(M, tm)
    if Mp != M:
        x2d = jnp.pad(x2d, ((0, Mp - M), (0, 0)))

    out = pl.pallas_call(
        matmul_bias_kernel,
        out_shape=jax.ShapeDtypeStruct((Mp, N), out_dtype),
        grid_spec=pltpu.PrefetchScalarGridSpec(
            num_scalar_prefetch=0,
            grid=(Mp // tm, N // tn),
            in_specs=[
                pl.BlockSpec((tm, K), lambda i, j: (i, 0)),
                pl.BlockSpec((K, tn), lambda i, j: (0, j)),
                pl.BlockSpec((1, tn), lambda i, j: (0, j)),
            ],
            out_specs=pl.BlockSpec((tm, tn), lambda i, j: (i, j)),
        ),
        compiler_params=pltpu.CompilerParams(
            dimension_semantics=("parallel", "parallel"),
            vmem_limit_bytes=_vmem_limit(footprint(tm, tn))),
    )(x2d, w, b_row)
    return out[:M] if Mp != M else out


def run_rnn_recurrence(pre_tmajor, whh_t, *, chunk_t=32, vmem_budget=24 << 20):
    """pre_tmajor: (T, B_pad, H_pad) f32, whh_t: (H_pad, H_pad).

    Returns (T, B_pad, H_pad) f32 hidden states. Hidden state is carried in a
    VMEM scratch across a sequential ("arbitrary") chunked time grid; the true T
    is scalar-prefetched so padded tail steps are skipped.
    """
    T, Bp, Hp = pre_tmajor.shape
    assert Hp % 128 == 0 and Bp % 8 == 0

    tc = min(chunk_t, T)

    def footprint(tc_):
        return (2 * tc_ * Bp * Hp * (pre_tmajor.dtype.itemsize + 4)   # pre in + f32 out, 2x buffered
                + 2 * Hp * Hp * whh_t.dtype.itemsize                  # resident W_hh^T
                + Bp * Hp * 4)                                         # h scratch

    # Re-derive chunk length against the VMEM budget (v7x: 64 MiB physical).
    while tc > 1 and footprint(tc) > vmem_budget:
        tc = max(1, tc // 2)

    Tp = pl.cdiv(T, tc) * tc
    if Tp != T:
        pre_tmajor = jnp.pad(pre_tmajor, ((0, Tp - T), (0, 0), (0, 0)))
    t_valid = jnp.array([T], jnp.int32)

    out = pl.pallas_call(
        rnn_recurrence_kernel,
        out_shape=jax.ShapeDtypeStruct((Tp, Bp, Hp), jnp.float32),
        grid_spec=pltpu.PrefetchScalarGridSpec(
            num_scalar_prefetch=1,
            grid=(Tp // tc,),
            in_specs=[
                pl.BlockSpec((tc, Bp, Hp), lambda c, tv: (c, 0, 0)),
                pl.BlockSpec((Hp, Hp), lambda c, tv: (0, 0)),   # W_hh^T resident
            ],
            out_specs=pl.BlockSpec((tc, Bp, Hp), lambda c, tv: (c, 0, 0)),
            scratch_shapes=[pltpu.VMEM((Bp, Hp), jnp.float32)],
        ),
        compiler_params=pltpu.CompilerParams(
            dimension_semantics=("arbitrary",),   # recurrence: strictly sequential
            vmem_limit_bytes=_vmem_limit(footprint(tc))),
    )(t_valid, pre_tmajor, whh_t)
    return out[:T] if Tp != T else out


def rnncell_model_forward(tokens_per_channel, params, *, compute_dtype=jnp.float32):
    """
    tokens_per_channel: list of int32 arrays [batch, seq]
    params: dict with 'emb' (list), 'wih','whh','bih','bhh', 'dec_w' (list), 'dec_b' (list)
    compute_dtype: dtype of matmul weight operands (jnp.float32 or jnp.bfloat16);
                   accumulation / tanh / outputs stay f32.
    Returns (decs, hidden) mirroring RNNCellModel.forward (rnn_type='RNN', dropout=0).
    """
    B, T = tokens_per_channel[0].shape
    num_channels = len(tokens_per_channel)
    H = params['whh'].shape[0]

    # Padded sizes: lane-dense hidden (128) and sublane-dense batch (8).
    H_pad = _round_up(H, 128)
    B_pad = _round_up(B, 8)

    # Embedding lookups (glue: gather in plain JAX), directly TIME-MAJOR via a
    # tiny int32 token transpose (avoids transposing the big activation).
    # TODO(synk): nn.Dropout is identity here (eval / p=0).
    embs = [jnp.take(params['emb'][c],
                     jnp.transpose(tokens_per_channel[c]), axis=0)
            for c in range(num_channels)]                       # each (T, B, E)
    x_tmajor = jnp.concatenate(embs, axis=2)                     # (T, B, I)
    I = x_tmajor.shape[2]
    if B_pad != B:
        x_tmajor = jnp.pad(x_tmajor, ((0, 0), (0, B_pad - B), (0, 0)))

    # Zero-padded weights: padded hidden lanes stay exactly 0 through the whole
    # recurrence (pre=0, W_hh padded rows AND cols = 0, bias pad = 0, tanh(0)=0).
    wih_t = jnp.pad(params['wih'], ((0, H_pad - H), (0, 0))).T.astype(compute_dtype)   # (I, H_pad)
    bias = jnp.pad(params['bih'] + params['bhh'], (0, H_pad - H))[None, :]              # (1, H_pad) f32
    whh_t = jnp.pad(params['whh'],
                    ((0, H_pad - H), (0, H_pad - H))).T.astype(compute_dtype)           # (H_pad, H_pad)

    # (1) Hoist input projection off the serial critical path: one batched
    #     matmul over all timesteps, biases pre-added into a single operand.
    pre_flat = run_matmul_bias(x_tmajor.reshape(T * B_pad, I), wih_t, bias)  # (T*B_pad, H_pad)
    pre_tmajor = pre_flat.reshape(T, B_pad, H_pad)

    # (2) Serial recurrence (only h @ W_hh^T + pre[t] + tanh per step).
    out_tmajor = run_rnn_recurrence(pre_tmajor, whh_t)           # (T, B_pad, H_pad)
    hidden = out_tmajor[T - 1, :B, :H]                            # (B, H)

    # (3) Fused, lane-dense decoder: all channels in one matmul, vocab axis
    #     concatenated and zero-padded to a multiple of 128 lanes.
    vocab_sizes = [params['dec_w'][c].shape[0] for c in range(num_channels)]
    v_tot = sum(vocab_sizes)
    v_pad = _round_up(v_tot, 128)
    w_cat = jnp.concatenate([params['dec_w'][c].T for c in range(num_channels)],
                            axis=1)                               # (H, v_tot)
    w_cat = jnp.pad(w_cat, ((0, H_pad - H), (0, v_pad - v_tot))).astype(compute_dtype)  # (H_pad, v_pad)
    b_cat = jnp.concatenate([params['dec_b'][c] for c in range(num_channels)])
    b_cat = jnp.pad(b_cat, (0, v_pad - v_tot))[None, :]           # (1, v_pad) f32

    flat = out_tmajor.reshape(T * B_pad, H_pad)                   # free reshape (time-major kept)
    logits_flat = run_matmul_bias(flat, w_cat, b_cat)             # (T*B_pad, v_pad)
    logits = logits_flat.reshape(T, B_pad, v_pad)

    decs = []
    off = 0
    for c in range(num_channels):
        v = vocab_sizes[c]
        decs.append(jnp.transpose(logits[:, :B, off:off + v], (1, 0, 2)))   # (B, T, V_c)
        off += v
    return decs, hidden


# ----------------------------------------------------------------------------
# Pure-JAX reference (for sanity check)
# ----------------------------------------------------------------------------
def reference_forward(tokens_per_channel, params):
    B, T = tokens_per_channel[0].shape
    embs = [jnp.take(params['emb'][c], tokens_per_channel[c], axis=0)
            for c in range(len(tokens_per_channel))]
    x = jnp.concatenate(embs, axis=2)
    h = jnp.zeros((B, params['whh'].shape[0]), jnp.float32)
    outs = []
    for t in range(T):
        h = jnp.tanh(x[:, t] @ params['wih'].T + params['bih']
                     + h @ params['whh'].T + params['bhh'])
        outs.append(h)
    output = jnp.stack(outs, axis=1)
    decs = [output @ params['dec_w'][c].T + params['dec_b'][c]
            for c in range(len(tokens_per_channel))]
    return decs, h


# ----------------------------------------------------------------------------
# Main
# ----------------------------------------------------------------------------
if __name__ == "__main__":
    # Model hyper-params (mirroring args): rnn_type='RNN', dropout=0 (eval)
    ntokens = [10, 12]          # per-channel vocab sizes
    num_channels = len(ntokens)
    emsize = 16
    nhid = 32
    batch, seq = 2, 8
    input_size = emsize * num_channels

    # Deterministic inputs
    key = jax.random.PRNGKey(0)
    k0, k1 = jax.random.split(key)
    tokens = [
        jax.random.randint(k0, (batch, seq), 0, ntokens[0], dtype=jnp.int32),
        jax.random.randint(k1, (batch, seq), 0, ntokens[1], dtype=jnp.int32),
    ]

    # Deterministic parameters (synthetic init, shapes per module __init__)
    wkey = jax.random.PRNGKey(1)
    ks = jax.random.split(wkey, 8)
    params = {
        'emb': [0.1 * jax.random.normal(ks[0], (ntokens[0], emsize), jnp.float32),
                0.1 * jax.random.normal(ks[1], (ntokens[1], emsize), jnp.float32)],
        'wih': 0.1 * jax.random.normal(ks[2], (nhid, input_size), jnp.float32),
        'whh': 0.1 * jax.random.normal(ks[3], (nhid, nhid), jnp.float32),
        'bih': 0.1 * jax.random.normal(ks[4], (nhid,), jnp.float32),
        'bhh': 0.1 * jax.random.normal(ks[5], (nhid,), jnp.float32),
        'dec_w': [0.1 * jax.random.normal(ks[6], (ntokens[0], nhid), jnp.float32),
                  0.1 * jax.random.normal(ks[7], (ntokens[1], nhid), jnp.float32)],
        'dec_b': [jnp.zeros((ntokens[0],), jnp.float32),
                  jnp.zeros((ntokens[1],), jnp.float32)],
    }

    ref_decs, ref_hidden = reference_forward(tokens, params)

    # f32 operand path: strict agreement with the pure-JAX reference.
    decs, hidden = rnncell_model_forward(tokens, params, compute_dtype=jnp.float32)
    decs = [jax.block_until_ready(d) for d in decs]
    hidden = jax.block_until_ready(hidden)
    for d, rd in zip(decs, ref_decs):
        assert d.shape == rd.shape
        assert jnp.allclose(d, rd, atol=1e-4, rtol=1e-4)
    assert jnp.allclose(hidden, ref_hidden, atol=1e-4, rtol=1e-4)

    # bf16 operand path (MXU-throughput-friendly, f32 accumulation): looser check.
    decs_bf, hidden_bf = rnncell_model_forward(tokens, params, compute_dtype=jnp.bfloat16)
    decs_bf = [jax.block_until_ready(d) for d in decs_bf]
    hidden_bf = jax.block_until_ready(hidden_bf)
    for d, rd in zip(decs_bf, ref_decs):
        assert d.shape == rd.shape
        assert jnp.allclose(d, rd, atol=3e-2, rtol=3e-2)
    assert jnp.allclose(hidden_bf, ref_hidden, atol=3e-2, rtol=3e-2)

    print("KERNEL_OK")
</pallas_src>

<mosaic_0001>
module attributes {stable_mosaic.version = 11 : i64} {
  func.func @matmul_bias_kernel(%arg0: i32, %arg1: i32, %arg2: memref<32x32xf32, #tpu.memory_space<vmem>>, %arg3: memref<32x128xf32, #tpu.memory_space<vmem>>, %arg4: memref<1x128xf32, #tpu.memory_space<vmem>>, %arg5: memref<32x128xf32, #tpu.memory_space<vmem>>) attributes {dimension_semantics = [#tpu.dimension_semantics<parallel>, #tpu.dimension_semantics<parallel>], iteration_bounds = array<i64: 2, 1>, scalar_prefetch = 0 : i64, scratch_operands = 0 : i64, tpu.core_type = #tpu.core_type<tc>, window_params = [{transform_indices = @transform_0, window_bounds = array<i64: 32, 32>}, {transform_indices = @transform_1, window_bounds = array<i64: 32, 128>}, {transform_indices = @transform_2, window_bounds = array<i64: 1, 128>}, {transform_indices = @transform_3, window_bounds = array<i64: 32, 128>}]} {
    %c0 = arith.constant 0 : index
    %c0_0 = arith.constant 0 : index
    %0 = vector.load %arg2[%c0, %c0_0] : memref<32x32xf32, #tpu.memory_space<vmem>>, vector<32x32xf32>
    %c0_1 = arith.constant 0 : index
    %c0_2 = arith.constant 0 : index
    %1 = vector.load %arg3[%c0_1, %c0_2] : memref<32x128xf32, #tpu.memory_space<vmem>>, vector<32x128xf32>
    %cst = arith.constant dense<0.000000e+00> : vector<32x128xf32>
    %2 = tpu.matmul %0, %1, %cst {dimension_numbers = #tpu.dot_dimension_numbers<[1], [0], [0], [1], [0, 0, 1, 1], [], []>} : vector<32x32xf32>, vector<32x128xf32>, vector<32x128xf32> -> vector<32x128xf32>
    %c0_3 = arith.constant 0 : index
    %c0_4 = arith.constant 0 : index
    %3 = vector.load %arg4[%c0_3, %c0_4] : memref<1x128xf32, #tpu.memory_space<vmem>>, vector<1x128xf32>
    %4 = vector.broadcast %3 : vector<1x128xf32> to vector<32x128xf32>
    %5 = arith.addf %2, %4 : vector<32x128xf32>
    %c0_5 = arith.constant 0 : index
    %c0_6 = arith.constant 0 : index
    %6 = vector.load %arg5[%c0_5, %c0_6] : memref<32x128xf32, #tpu.memory_space<vmem>>, vector<32x128xf32>
    tpu.vector_store %arg5[%c0_5, %c0_6], %5 {strides = array<i32>} : memref<32x128xf32, #tpu.memory_space<vmem>>, vector<32x128xf32>,
    return
  }
  func.func @transform_0(%arg0: i32, %arg1: i32) -> (i32, i32) {
    %c0_i32 = arith.constant 0 : i32
    %c0_i32_0 = arith.constant 0 : i32
    return %arg0, %c0_i32 : i32, i32
  }
  func.func @transform_1(%arg0: i32, %arg1: i32) -> (i32, i32) {
    %c0_i32 = arith.constant 0 : i32
    %c0_i32_0 = arith.constant 0 : i32
    return %c0_i32, %arg1 : i32, i32
  }
  func.func @transform_2(%arg0: i32, %arg1: i32) -> (i32, i32) {
    %c0_i32 = arith.constant 0 : i32
    %c0_i32_0 = arith.constant 0 : i32
    return %c0_i32, %arg1 : i32, i32
  }
  func.func @transform_3(%arg0: i32, %arg1: i32) -> (i32, i32) {
    %c0_i32 = arith.constant 0 : i32
    return %arg0, %arg1 : i32, i32
  }
}

</mosaic_0001>

<llo_original>
// kernel: tpu_custom_call.1
$region0: #{tpu_custom_call.1}
  #allocation0 [shape = 'u32[]', space=smem, size = 0x4, offset = 0x4, fixed_abs, tag = 'smem constant byte address 0x4 - core index']
  #allocation1 [shape = 'u32[144,128]{1,0:T(1,128)}', space=vmem, size = 0x12000, scoped, tag = 'internal scratch']
  %s0 = inlined_call_operand.vmem [shape: f32[64,32], index: 0, kind: input, shape index: {}]
  %s1 = inlined_call_operand.vmem [shape: f32[32,128], index: 1, kind: input, shape index: {}]
  %s2 = inlined_call_operand.vmem [shape: f32[1,128], index: 2, kind: input, shape index: {}]
  %s3 = inlined_call_operand.hbm [shape: f32[64,128], index: 3, kind: output, shape index: {}]
  %s4 = sld [smem:[#allocation0]]
  $region45: #{tpu_custom_call.1} parent=0
    _
  %s6 = ssub.s32 1, %s4
  %s7 = scalar_select 0, %s6, %s4
  $region1: #{tpu_custom_call.1} parent=0
    #allocation2 [shape = 'u8[32768]{0}', space=vmem, size = 0x8000, scoped, tag = 'output window, operand 0']
    #allocation3 [shape = 's32[2]{0}', space=sflag, size = 0x8, scoped, tag = 'scoped memory for tpu_custom_call.1']
    %8 = vsyncpa [#allocation3], 0
    %s9 = scalar_lea.sflag [#allocation3], 1
    %10 = vsyncpa %s9, 0
    loop: start=0, step=1, limit=4
    $region2: #{tpu_custom_call.1} parent=1 // loop_pre_header
      _
    $region3: #{tpu_custom_call.1} parent=1 // loop_header
      %s12 = sphi 0, %s16
      %p13 = scmp.ge.s32.totalorder %s12, 4
      %s19 = sphi 0, %s31
      %s20 = sphi 0, %s27
      %s21 = sphi 0, %s19
      %s22 = sphi 0, %s20
      %s23 = sphi 0, %s21
      %s24 = sphi 0, %s22
      %s34 = sphi 0, %s36
      %s37 = sphi 0, %s34
      %s38 = sphi 0, %s37
      %s54 = sphi 0, %s38
      %s60 = sphi 0, %s62
      %s63 = sphi 0, %s60
      %s64 = sphi 0, %s63
      %s80 = sphi 0, %s64
      %s86 = sphi 0, %s88
      %s89 = sphi 0, %s86
      %s90 = sphi 0, %s89
      %s106 = sphi 0, %s90
      %s114 = sphi 0, %s116
      %s117 = sphi 0, %s114
      %s118 = sphi 0, %s117
      %s134 = sphi 0, %s118
    $region4: #{tpu_custom_call.1} parent=1 // loop_header_branch
      %15 = sbr.rel (%p13) target = $region8
    $region5: #{tpu_custom_call.1} parent=1 // loop_body
      %s17 = ssub.s32 %s12, 1
      %s18 = ssub.s32 %s12, 2
      %s25 = sadd.s32 1, %s20
      %p26 = scmp.ge.s32.totalorder %s25, 1
      %s27 = scalar_select %p26, 0, %s25
      %s28 = sadd.s32 1, %s19
      %s29 = scalar_select %p26, %s28, %s19
      %p30 = scmp.ge.s32.totalorder %s29, 2
      %s31 = scalar_select %p30, 0, %s29
      %s32 = ssub.s32 %s19, %s31
      %p33 = scmp.eq.s32.totalorder %s32, 0
      %s35 = sadd.s32 %s34, 1
      %s36 = scalar_select %p33, %s34, %s35
      %p39 = pneg %p33
      %p40 = scmp.eq.s32.totalorder %s12, 1
      %p41 = por %p39, %p40
      %p42 = scmp.ne.s32.totalorder %s34, %s37
      %p43 = scmp.eq.s32.totalorder %s12, 0
      %p44 = por %p42, %p43
      %p45 = scmp.ne.s32.totalorder %s34, %s37
      %p46 = scmp.eq.s32.totalorder %s17, 1
      %p47 = por %p45, %p46
      %p48 = scmp.ne.s32.totalorder %s37, %s38
      %p49 = scmp.eq.s32.totalorder %s17, 0
      %p50 = por %p48, %p49
      %p51 = scmp.ne.s32.totalorder %s37, %s38
      %p52 = scmp.eq.s32.totalorder %s18, 1
      %p53 = por %p51, %p52
      %p55 = scmp.ne.s32.totalorder %s38, %s54
      %p56 = scmp.eq.s32.totalorder %s18, 0
      %p57 = por %p55, %p56
      %s58 = ssub.s32 %s20, %s27
      %p59 = scmp.eq.s32.totalorder %s58, 0
      %s61 = sadd.s32 %s60, 1
      %s62 = scalar_select %p59, %s60, %s61
      %p65 = pneg %p59
      %p66 = scmp.eq.s32.totalorder %s12, 1
      %p67 = por %p65, %p66
      %p68 = scmp.ne.s32.totalorder %s60, %s63
      %p69 = scmp.eq.s32.totalorder %s12, 0
      %p70 = por %p68, %p69
      %p71 = scmp.ne.s32.totalorder %s60, %s63
      %p72 = scmp.eq.s32.totalorder %s17, 1
      %p73 = por %p71, %p72
      %p74 = scmp.ne.s32.totalorder %s63, %s64
      %p75 = scmp.eq.s32.totalorder %s17, 0
      %p76 = por %p74, %p75
      %p77 = scmp.ne.s32.totalorder %s63, %s64
      %p78 = scmp.eq.s32.totalorder %s18, 1
      %p79 = por %p77, %p78
      %p81 = scmp.ne.s32.totalorder %s64, %s80
      %p82 = scmp.eq.s32.totalorder %s18, 0
      %p83 = por %p81, %p82
      %s84 = ssub.s32 %s20, %s27
      %p85 = scmp.eq.s32.totalorder %s84, 0
      %s87 = sadd.s32 %s86, 1
      %s88 = scalar_select %p85, %s86, %s87
      %p91 = pneg %p85
      %p92 = scmp.eq.s32.totalorder %s12, 1
      %p93 = por %p91, %p92
      %p94 = scmp.ne.s32.totalorder %s86, %s89
      %p95 = scmp.eq.s32.totalorder %s12, 0
      %p96 = por %p94, %p95
      %p97 = scmp.ne.s32.totalorder %s86, %s89
      %p98 = scmp.eq.s32.totalorder %s17, 1
      %p99 = por %p97, %p98
      %p100 = scmp.ne.s32.totalorder %s89, %s90
      %p101 = scmp.eq.s32.totalorder %s17, 0
      %p102 = por %p100, %p101
      %p103 = scmp.ne.s32.totalorder %s89, %s90
      %p104 = scmp.eq.s32.totalorder %s18, 1
      %p105 = por %p103, %p104
      %p107 = scmp.ne.s32.totalorder %s90, %s106
      %p108 = scmp.eq.s32.totalorder %s18, 0
      %p109 = por %p107, %p108
      %s110 = ssub.s32 %s19, %s31
      %s111 = ssub.s32 %s20, %s27
      %s112 = sor.u32 %s110, %s111
      %p113 = scmp.eq.s32.totalorder %s112, 0
      %s115 = sadd.s32 %s114, 1
      %s116 = scalar_select %p113, %s114, %s115
      %p119 = pneg %p113
      %p120 = scmp.eq.s32.totalorder %s12, 1
      %p121 = por %p119, %p120
      %p122 = scmp.ne.s32.totalorder %s114, %s117
      %p123 = scmp.eq.s32.totalorder %s12, 0
      %p124 = por %p122, %p123
      %p125 = scmp.ne.s32.totalorder %s114, %s117
      %p126 = scmp.eq.s32.totalorder %s17, 1
      %p127 = por %p125, %p126
      %p128 = scmp.ne.s32.totalorder %s117, %s118
      %p129 = scmp.eq.s32.totalorder %s17, 0
      %p130 = por %p128, %p129
      %p131 = scmp.ne.s32.totalorder %s117, %s118
      %p132 = scmp.eq.s32.totalorder %s18, 1
      %p133 = por %p131, %p132
      %p135 = scmp.ne.s32.totalorder %s118, %s134
      %p136 = scmp.eq.s32.totalorder %s18, 0
      %p137 = por %p135, %p136
      %p138 = scmp.le.s32.totalorder 1, %s12
      %p139 = scmp.lt.s32.totalorder %s12, 3
      %p140 = pnand %p138, %p139
      %p141 = pneg %p140
      // Predicated region
      $region9: #{tpu_custom_call.1} parent=5 // pred_check
        _
      $region10: #{tpu_custom_call.1} parent=5 // pred_check_branch
        %143 = sbr.rel (%p140) target = $region12
      $region11: #{tpu_custom_call.1} parent=5 // pred_region
        %s144 = ssub.s32 %s12, 1
        // Predicated region
        $region13: #{tpu_custom_call.1} parent=11 // pred_check
          %p145 = pneg %p76
        $region14: #{tpu_custom_call.1} parent=11 // pred_check_branch
          %147 = sbr.rel (%p145) target = $region16
        $region15: #{tpu_custom_call.1} parent=11 // pred_region
          %p148 = scmp.lt.s32.totalorder %s22, 0
          %s149 = scalar_select %p148, %s22, 0
          %s150 = smul.addr %s149, 8
          %s151 = scalar_lea.vmem %s1, %s150
        $region16: #{tpu_custom_call.1} parent=11 // pred_fallthru
          _
        // Predicated region
        $region17: #{tpu_custom_call.1} parent=11 // pred_check
          %p152 = pneg %p102
        $region18: #{tpu_custom_call.1} parent=11 // pred_check_branch
          %154 = sbr.rel (%p152) target = $region20
        $region19: #{tpu_custom_call.1} parent=11 // pred_region
          %p155 = scmp.lt.s32.totalorder %s22, 0
          %s156 = scalar_select %p155, %s22, 0
          %s157 = scalar_lea.vmem %s2, %s156
        $region20: #{tpu_custom_call.1} parent=11 // pred_fallthru
          _
      $region12: #{tpu_custom_call.1} parent=5 // pred_fallthru
        _
      %p158 = scmp.lt.s32.totalorder %s12, 2
      // Predicated region
      $region21: #{tpu_custom_call.1} parent=5 // pred_check
        %p159 = pneg %p158
      $region22: #{tpu_custom_call.1} parent=5 // pred_check_branch
        %161 = sbr.rel (%p159) target = $region24
      $region23: #{tpu_custom_call.1} parent=5 // pred_region
        // Predicated region
        $region25: #{tpu_custom_call.1} parent=23 // pred_check
          %p162 = pneg %p44
        $region26: #{tpu_custom_call.1} parent=23 // pred_check_branch
          %164 = sbr.rel (%p162) target = $region28
        $region27: #{tpu_custom_call.1} parent=23 // pred_region
          %s165 = smul.u32 4, %s19
          %p166 = scmp.lt.s32.totalorder %s165, 7
          %s167 = scalar_select %p166, %s165, 7
          %s168 = smul.addr %s167, 8
          %s169 = scalar_lea.vmem %s0, %s168
          %s170 = smul.u32 4, %s19
        $region28: #{tpu_custom_call.1} parent=23 // pred_fallthru
          _
      $region24: #{tpu_custom_call.1} parent=5 // pred_fallthru
        _
      %p171 = scmp.le.s32.totalorder 1, %s12
      %p172 = scmp.lt.s32.totalorder %s12, 3
      %p173 = pnand %p171, %p172
      %p174 = pneg %p173
      // Predicated region
      $region29: #{tpu_custom_call.1} parent=5 // pred_check
        _
      $region30: #{tpu_custom_call.1} parent=5 // pred_check_branch
        %176 = sbr.rel (%p173) target = $region32
      $region31: #{tpu_custom_call.1} parent=5 // pred_region
        %s177 = ssub.s32 %s12, 1
        %s178 = smul.u32 4, %s21
        %p179 = scmp.lt.s32.totalorder %s178, 7
        %s180 = scalar_select %p179, %s178, 7
        %s181 = smul.addr %s180, 8
        %s182 = scalar_lea.vmem %s0, %s181
        %p183 = pneg %p50
        %p184 = pneg %p47
        %p185 = scmp.lt.s32.totalorder %s22, 0
        %s186 = scalar_select %p185, %s22, 0
        %s187 = smul.addr %s186, 8
        %s188 = scalar_lea.vmem %s1, %s187
        %p189 = pneg %p76
        %p190 = pneg %p73
        %p191 = scmp.lt.s32.totalorder %s22, 0
        %s192 = scalar_select %p191, %s22, 0
        %s193 = scalar_lea.vmem %s2, %s192
        %p194 = pneg %p102
        %p195 = pneg %p99
        %p196 = pneg %p130
        %p197 = pneg %p127
        %s198 = sand.u32 %s117, 1
        %s199 = scalar_lea.sflag [#allocation3], %s198
        %s200 = sand.u32 %s117, 1
        %s201 = smul.addr %s200, 32
        %s202 = scalar_lea.vmem [#allocation2], %s201
        %s203 = smul.u32 4, %s21
        %p204 = scmp.lt.s32.totalorder %s203, 7
        %s205 = scalar_select %p204, %s203, 7
        %s206 = smul.addr %s205, 8
        %s207 = scalar_lea.vmem %s0, %s206
        %s208 = smul.u32 4, %s21
        %p209 = scmp.lt.s32.totalorder %s22, 0
        %s210 = scalar_select %p209, %s22, 0
        %s211 = smul.addr %s210, 8
        %s212 = scalar_lea.vmem %s1, %s211
        %p213 = scmp.lt.s32.totalorder %s22, 0
        %s214 = scalar_select %p213, %s22, 0
        %s215 = scalar_lea.vmem %s2, %s214
        %s216 = smul.u32 4, %s21
        %v217 = vld [vmem:[%s207] sm:$0xff]
        %v218 = vld [vmem:[%s207 + $0x8] sm:$0xff]
        %v219 = vld [vmem:[%s207 + $0x10] sm:$0xff]
        %v220 = vld [vmem:[%s207 + $0x18] sm:$0xff]
        %v221 = vld [vmem:[%s212] sm:$0xff]
        %v222 = vld [vmem:[%s212 + $0x8] sm:$0xff]
        %v223 = vld [vmem:[%s212 + $0x10] sm:$0xff]
        %v224 = vld [vmem:[%s212 + $0x18] sm:$0xff]
        %v225 = vld [vmem:[%s215] sm:$0x1]
        %v227 = vlaneseq
        %v228 = vshrl.u32 %v227, 7
        %v229 = vsub.s32 0, %v228
        %v230 = vrot.slane %v225, %v229
        %vm232 = vcmask 261120
        %v234 = vsel %vm232, %v217, 0
        %v237 = vsel %vm232, %v218, 0
        %v240 = vsel %vm232, %v219, 0
        %v243 = vsel %vm232, %v220, 0
        %245 = vmatprep.subr.mxu0 0.0
        %246 = vmatpush1.msra.mxu0 %v221
        %247 = vmatprep.subr.mxu0 0.0
        %248 = vmatpush1.msra.mxu0 %v222
        %249 = vmatprep.subr.mxu0 0.0
        %250 = vmatpush1.msra.mxu0 %v223
        %251 = vmatprep.subr.mxu0 0.0
        %252 = vmatpush1.msra.mxu0 %v224
        %253 = vmatprep.subr.mxu0 0.0
        %254 = vmatpush1.msra.mxu0 0.0
        %255 = vmatprep.subr.mxu0 0.0
        %256 = vmatpush1.msra.mxu0 0.0
        %257 = vmatprep.subr.mxu0 0.0
        %258 = vmatpush1.msra.mxu0 0.0
        %259 = vmatprep.subr.mxu0 0.0
        %260 = vmatpush1.msra.mxu0 0.0
        %261 = vmatprep.subr.mxu0 0.0
        %262 = vmatpush1.msra.mxu0 0.0
        %263 = vmatprep.subr.mxu0 0.0
        %264 = vmatpush1.msra.mxu0 0.0
        %265 = vmatprep.subr.mxu0 0.0
        %266 = vmatpush1.msra.mxu0 0.0
        %267 = vmatprep.subr.mxu0 0.0
        %268 = vmatpush1.msra.mxu0 0.0
        %269 = vmatprep.subr.mxu0 0.0
        %270 = vmatpush1.msra.mxu0 0.0
        %271 = vmatprep.subr.mxu0 0.0
        %272 = vmatpush1.msra.mxu0 0.0
        %273 = vmatprep.subr.mxu0 0.0
        %274 = vmatpush1.msra.mxu0 0.0
        %275 = vmatprep.subr.mxu0 0.0
        %276 = vmatpush1.msra.mxu0 0.0
        %277 = vmatprep.subr.mxu0 0.0
        %278 = vmatpush1.msra.mxu0 0.0
        %279 = vmatprep.subr.mxu0 0.0
        %280 = vmatpush1.msra.mxu0 0.0
        %281 = vmatprep.subr.mxu0 0.0
        %282 = vmatpush1.msra.mxu0 0.0
        %283 = vmatprep.subr.mxu0 0.0
        %284 = vmatpush1.msra.mxu0 0.0
        %285 = vmatprep.subr.mxu0 0.0
        %286 = vmatpush1.msra.mxu0 0.0
        %287 = vmatprep.subr.mxu0 0.0
        %288 = vmatpush1.msra.mxu0 0.0
        %289 = vmatprep.subr.mxu0 0.0
        %290 = vmatpush1.msra.mxu0 0.0
        %291 = vmatprep.subr.mxu0 0.0
        %292 = vmatpush1.msra.mxu0 0.0
        %293 = vmatprep.subr.mxu0 0.0
        %294 = vmatpush1.msra.mxu0 0.0
        %295 = vmatprep.subr.mxu0 0.0
        %296 = vmatpush1.msra.mxu0 0.0
        %297 = vmatprep.subr.mxu0 0.0
        %298 = vmatpush1.msra.mxu0 0.0
        %299 = vmatprep.subr.mxu0 0.0
        %300 = vmatpush1.msra.mxu0 0.0
        %301 = vmatprep.subr.mxu0 0.0
        %302 = vmatpush1.msra.mxu0 0.0
        %303 = vmatprep.subr.mxu0 0.0
        %304 = vmatpush1.msra.mxu0 0.0
        %305 = vmatprep.subr.mxu0 0.0
        %306 = vmatpush1.msra.mxu0 0.0
        %307 = vmatprep.subr.mxu0 0.0
        %308 = vmatpush1.msra.mxu0 0.0
        %309 = vmatprep.mubr.f32.mxu0 0.0
        %310 = vmatmul.mubr.f32.gmra.mrb[0].mxu0 %v234
        %v311 = vpop.f32.mrb[0].mxu0
        %v312 = vadd.f32 %v230, %v311
        %v313 = vpop.f32.mrb[0].mxu0
        %314 = vmatprep.mubr.f32.mxu0 0.0
        %315 = vmatmul.mubr.f32.gmra.mrb[0].mxu0 %v237
        %v316 = vpop.f32.mrb[0].mxu0
        %v317 = vadd.f32 %v230, %v316
        %v318 = vpop.f32.mrb[0].mxu0
        %319 = vmatprep.mubr.f32.mxu0 0.0
        %320 = vmatmul.mubr.f32.gmra.mrb[0].mxu0 %v240
        %v321 = vpop.f32.mrb[0].mxu0
        %v322 = vadd.f32 %v230, %v321
        %v323 = vpop.f32.mrb[0].mxu0
        %324 = vmatprep.mubr.f32.mxu0 0.0
        %325 = vmatmul.mubr.f32.gmra.mrb[0].mxu0 %v243
        %v326 = vpop.f32.mrb[0].mxu0
        %v327 = vadd.f32 %v230, %v326
        %v328 = vpop.f32.mrb[0].mxu0
        %329 = vdwg.mxu0
        %330 = vst [vmem:[%s202] sm:$0xff] %v312
        %331 = vst [vmem:[%s202 + $0x8] sm:$0xff] %v317
        %332 = vst [vmem:[%s202 + $0x10] sm:$0xff] %v322
        %333 = vst [vmem:[%s202 + $0x18] sm:$0xff] %v327
        %s334 = sand.u32 %s117, 1
        %s335 = scalar_lea.sflag [#allocation3], %s334
        %s336 = sand.u32 %s117, 1
        %s337 = smul.addr %s336, 32
        %s338 = scalar_lea.vmem [#allocation2], %s337
        // Predicated region
        $region33: #{tpu_custom_call.1} parent=31 // pred_check
          %p339 = pneg %p127
        $region34: #{tpu_custom_call.1} parent=31 // pred_check_branch
          %341 = sbr.rel (%p339) target = $region36
        $region35: #{tpu_custom_call.1} parent=31 // pred_region
          %s342 = smul.u32 4, %s21
          %s344 = ssub.s32 512, 512
          %345 = vsyncadd %s335, %s344
          %s346 = sadd.s32 %s22, %s342
          %s347 = smul.addr %s346, 128
          %s348 = scalar_lea.hbm %s3, %s347
          %s349 = sshll.u32 %s338, 4
          %s350 = int_to_ptr.vmem [resolvable:$true] %s349
          %355 = dma.vmem_to_hbm [thread:$0]  %s350, 512, %s348, %s335, 128, 128, 8
        $region36: #{tpu_custom_call.1} parent=31 // pred_fallthru
          _
      $region32: #{tpu_custom_call.1} parent=5 // pred_fallthru
        _
      %p356 = scmp.le.s32.totalorder 2, %s12
      // Predicated region
      $region37: #{tpu_custom_call.1} parent=5 // pred_check
        %p357 = pneg %p356
      $region38: #{tpu_custom_call.1} parent=5 // pred_check_branch
        %359 = sbr.rel (%p357) target = $region40
      $region39: #{tpu_custom_call.1} parent=5 // pred_region
        %s360 = ssub.s32 %s12, 2
        // Predicated region
        $region41: #{tpu_custom_call.1} parent=39 // pred_check
          %p361 = pneg %p133
        $region42: #{tpu_custom_call.1} parent=39 // pred_check_branch
          %363 = sbr.rel (%p361) target = $region44
        $region43: #{tpu_custom_call.1} parent=39 // pred_region
          %s364 = sand.u32 %s118, 1
          %s365 = scalar_lea.sflag [#allocation3], %s364
          %s366 = sand.u32 %s118, 1
          %s367 = smul.addr %s366, 32
          %s368 = scalar_lea.vmem [#allocation2], %s367
          %369 = dma.done %s365, 512
        $region44: #{tpu_custom_call.1} parent=39 // pred_fallthru
          _
      $region40: #{tpu_custom_call.1} parent=5 // pred_fallthru
        _
    $region6: #{tpu_custom_call.1} parent=1 // loop_footer
      %s16 = sadd.s32 1, %s12
    $region7: #{tpu_custom_call.1} parent=1 // loop_footer_branch
      %11 = sbr.rel target = $region3
    $region8: #{tpu_custom_call.1} parent=1 // loop_exit
      _
    %370 = vsyncpa [#allocation3], 1
    %s371 = scalar_lea.sflag [#allocation3], 1
    %372 = vsyncpa %s371, 1

</llo_original>
